<compile_context>
chip_gen: v7x
topology: tpu7x:2x2x1
jax: 0.10.0
libtpu: 0.0.40
codegen_flags: <defaults>
</compile_context>

<pallas_src>
import functools

import jax
import jax.numpy as jnp
from jax.experimental import pallas as pl
from jax.experimental.pallas import tpu as pltpu


def _sum_fusion_kernel(x_ref, y_ref, wx_ref, bx_ref, wy_ref, by_ref,
                       ox_ref, oy_ref, osum_ref, *, compute_dtype):
    # In-kernel cast: activations are read from HBM exactly once (as stored),
    # the bf16 conversion rides the VPU for free, and the MXU runs at its
    # native bf16 rate with f32 accumulation.
    xb = x_ref[...].astype(compute_dtype)
    yb = y_ref[...].astype(compute_dtype)
    out_x = jnp.dot(xb, wx_ref[...],
                    preferred_element_type=jnp.float32) + bx_ref[...]
    out_y = jnp.dot(yb, wy_ref[...],
                    preferred_element_type=jnp.float32) + by_ref[...]
    ox_ref[...] = out_x.astype(ox_ref.dtype)
    oy_ref[...] = out_y.astype(oy_ref.dtype)
    osum_ref[...] = (out_x + out_y).astype(osum_ref.dtype)


def prepare_params(wx, bx, wy, by, compute_dtype=jnp.bfloat16):
    """One-time parameter repack (call OUTSIDE the hot path).

    PyTorch stores Linear weights as (O, D); the kernel wants (D, O) so the
    matmul is a plain x @ W with no per-call transpose.  bf16 halves weight
    HBM traffic; pass compute_dtype=jnp.float32 for exact f32 parity.
    Biases stay f32 (added to the f32 accumulator).
    """
    O = wx.shape[0]
    return (jnp.asarray(wx.T, compute_dtype),
            jnp.asarray(bx, jnp.float32).reshape(1, O),
            jnp.asarray(wy.T, compute_dtype),
            jnp.asarray(by, jnp.float32).reshape(1, O))


def _pick_block_m(B):
    # Prefer >=4 grid steps (input/output DMA overlap + both v7x TensorCores),
    # falling back to >=2; cap the tile at 256 rows (v7x VMEM headroom).
    for min_steps in (4, 2):
        for tm in (256, 128, 64, 32, 16, 8):
            if pl.cdiv(B, tm) >= min_steps:
                return tm
    return B  # tiny batch: single full-extent tile (satisfies the (8,128) rule)


def sum_fusion(x, y, wx_t, bx, wy_t, by, *, out_dtype=None):
    """x, y: (B, D) float; wx_t, wy_t: (D, O) (see prepare_params); bx, by: (1, O) f32.

    Returns (out_x, out_y, out_x + out_y), each (B, O) in `out_dtype`
    (defaults to x.dtype; pass jnp.bfloat16 to halve output HBM bytes if the
    consumers tolerate it).
    """
    B, D = x.shape
    O = wx_t.shape[1]
    out_dtype = x.dtype if out_dtype is None else out_dtype
    compute_dtype = wx_t.dtype

    tm = _pick_block_m(B)
    grid = (pl.cdiv(B, tm),)

    in_isz = jnp.dtype(x.dtype).itemsize
    w_isz = jnp.dtype(compute_dtype).itemsize
    o_isz = jnp.dtype(out_dtype).itemsize
    vmem_bytes = (
        2 * 2 * tm * D * in_isz      # x, y activation tiles (double-buffered)
        + 2 * D * O * w_isz          # two weights, single-buffered (Buffered(1))
        + 2 * 8 * O * 4              # two biases (sublane-padded), single-buffered
        + 2 * 3 * tm * O * o_isz     # three output tiles (double-buffered)
    )
    # v7x has only 64 MiB physical VMEM -> keep a real safety margin.  For
    # larger D*O, switch to a K/N-tiled grid with an f32 VMEM accumulator.
    assert vmem_bytes < 48 * 1024 * 1024, \
        "working set too large for the single-K/N-block kernel; tile K/N"
    # Explicit scoped-VMEM limit: the v5e default (~16 MiB) is smaller than
    # v6e/v7x (~32 MiB); size it from the working set with headroom.
    vmem_limit = int(min(max(2 * vmem_bytes, 32 * 1024 * 1024),
                         56 * 1024 * 1024))

    act_spec = pl.BlockSpec((tm, D), lambda i: (i, 0))
    # Constant index_map -> DMA'd once; Buffered(1) -> single VMEM buffer
    # (no wasted double-buffer for data that never changes across the grid).
    w_spec = pl.BlockSpec((D, O), lambda i: (0, 0), pipeline_mode=pl.Buffered(1))
    b_spec = pl.BlockSpec((1, O), lambda i: (0, 0), pipeline_mode=pl.Buffered(1))
    out_spec = pl.BlockSpec((tm, O), lambda i: (i, 0))

    out_shapes = tuple(jax.ShapeDtypeStruct((B, O), out_dtype) for _ in range(3))

    kernel = functools.partial(_sum_fusion_kernel, compute_dtype=compute_dtype)

    return pl.pallas_call(
        kernel,
        out_shape=out_shapes,
        grid_spec=pltpu.PrefetchScalarGridSpec(
            num_scalar_prefetch=0,
            grid=grid,
            in_specs=[act_spec, act_spec, w_spec, b_spec, w_spec, b_spec],
            out_specs=[out_spec, out_spec, out_spec],
        ),
        compiler_params=pltpu.CompilerParams(
            # Batch tiles are independent -> both v7x TensorCores share them.
            dimension_semantics=("parallel",),
            vmem_limit_bytes=vmem_limit,
        ),
    )(x, y, wx_t, bx, wy_t, by)


def _check(x, y, wx, bx, wy, by, wx_t, bx2, wy_t, by2, outs):
    out_x, out_y, output = outs
    # Tight check vs. a reference using the same bf16-cast operands + f32 acc.
    x_c = x.astype(wx_t.dtype)
    y_c = y.astype(wy_t.dtype)
    ref_x_bf = jnp.dot(x_c, wx_t, preferred_element_type=jnp.float32) + bx2
    ref_y_bf = jnp.dot(y_c, wy_t, preferred_element_type=jnp.float32) + by2
    assert jnp.allclose(out_x, ref_x_bf, atol=1e-3), "out_x mismatch (bf16 ref)"
    assert jnp.allclose(out_y, ref_y_bf, atol=1e-3), "out_y mismatch (bf16 ref)"
    assert jnp.allclose(output, ref_x_bf + ref_y_bf, atol=1e-3), \
        "output mismatch (bf16 ref)"
    # Loose check vs. the exact f32 PyTorch semantics (bf16 rounding only).
    ref_x = x @ wx.T + bx
    ref_y = y @ wy.T + by
    assert jnp.allclose(out_x, ref_x, atol=5e-2, rtol=5e-2), "out_x mismatch (f32 ref)"
    assert jnp.allclose(out_y, ref_y, atol=5e-2, rtol=5e-2), "out_y mismatch (f32 ref)"
    assert jnp.allclose(output, ref_x + ref_y, atol=5e-2, rtol=5e-2), \
        "output mismatch (f32 ref)"


if __name__ == "__main__":
    # Small, lane-aligned shapes consistent with SumFusion(input_dim, output_dim).
    B, INPUT_DIM, OUTPUT_DIM = 256, 256, 128

    key = jax.random.PRNGKey(0)
    kx, ky, kwx, kbx, kwy, kby = jax.random.split(key, 6)

    x = jax.random.normal(kx, (B, INPUT_DIM), dtype=jnp.float32)
    y = jax.random.normal(ky, (B, INPUT_DIM), dtype=jnp.float32)

    # PyTorch-shaped parameters: weight (O, D), bias (O,).
    bound = 1.0 / (INPUT_DIM ** 0.5)
    wx = jax.random.uniform(kwx, (OUTPUT_DIM, INPUT_DIM), jnp.float32, -bound, bound)
    bx = jax.random.uniform(kbx, (OUTPUT_DIM,), jnp.float32, -bound, bound)
    wy = jax.random.uniform(kwy, (OUTPUT_DIM, INPUT_DIM), jnp.float32, -bound, bound)
    by = jax.random.uniform(kby, (OUTPUT_DIM,), jnp.float32, -bound, bound)

    # One-time repack (kept out of the hot path).
    wx_t, bx2, wy_t, by2 = prepare_params(wx, bx, wy, by)

    # Divisible batch: tm=64 -> grid=(4,) -> pipelining + both v7x cores.
    outs = sum_fusion(x, y, wx_t, bx2, wy_t, by2)
    jax.block_until_ready(outs)
    _check(x, y, wx, bx, wy, by, wx_t, bx2, wy_t, by2, outs)

    # Ragged batch (B=200 not divisible by the tile): fixed tm + cdiv grid,
    # masked last tile; exercises the non-divisible-B path.
    Br = 200
    xr, yr = x[:Br], y[:Br]
    outs_r = sum_fusion(xr, yr, wx_t, bx2, wy_t, by2)
    jax.block_until_ready(outs_r)
    _check(xr, yr, wx, bx, wy, by, wx_t, bx2, wy_t, by2, outs_r)

    print("KERNEL_OK")
</pallas_src>

<mosaic_0001>
module attributes {stable_mosaic.version = 11 : i64} {
  func.func @_sum_fusion_kernel(%arg0: i32, %arg1: memref<64x256xf32, #tpu.memory_space<vmem>>, %arg2: memref<64x256xf32, #tpu.memory_space<vmem>>, %arg3: memref<256x128xbf16, #tpu.memory_space<vmem>>, %arg4: memref<1x128xf32, #tpu.memory_space<vmem>>, %arg5: memref<256x128xbf16, #tpu.memory_space<vmem>>, %arg6: memref<1x128xf32, #tpu.memory_space<vmem>>, %arg7: memref<64x128xf32, #tpu.memory_space<vmem>>, %arg8: memref<64x128xf32, #tpu.memory_space<vmem>>, %arg9: memref<64x128xf32, #tpu.memory_space<vmem>>) attributes {dimension_semantics = [#tpu.dimension_semantics<parallel>], iteration_bounds = array<i64: 4>, scalar_prefetch = 0 : i64, scratch_operands = 0 : i64, tpu.core_type = #tpu.core_type<tc>, window_params = [{transform_indices = @transform_0, window_bounds = array<i64: 64, 256>}, {transform_indices = @transform_1, window_bounds = array<i64: 64, 256>}, {pipeline_mode = #tpu.pipeline_mode<synchronous>, transform_indices = @transform_2, window_bounds = array<i64: 256, 128>}, {pipeline_mode = #tpu.pipeline_mode<synchronous>, transform_indices = @transform_3, window_bounds = array<i64: 1, 128>}, {pipeline_mode = #tpu.pipeline_mode<synchronous>, transform_indices = @transform_4, window_bounds = array<i64: 256, 128>}, {pipeline_mode = #tpu.pipeline_mode<synchronous>, transform_indices = @transform_5, window_bounds = array<i64: 1, 128>}, {transform_indices = @transform_6, window_bounds = array<i64: 64, 128>}, {transform_indices = @transform_7, window_bounds = array<i64: 64, 128>}, {transform_indices = @transform_8, window_bounds = array<i64: 64, 128>}]} {
    %c0 = arith.constant 0 : index
    %c0_0 = arith.constant 0 : index
    %0 = vector.load %arg1[%c0, %c0_0] : memref<64x256xf32, #tpu.memory_space<vmem>>, vector<64x256xf32>
    %1 = arith.truncf %0 : vector<64x256xf32> to vector<64x256xbf16>
    %c0_1 = arith.constant 0 : index
    %c0_2 = arith.constant 0 : index
    %2 = vector.load %arg2[%c0_1, %c0_2] : memref<64x256xf32, #tpu.memory_space<vmem>>, vector<64x256xf32>
    %3 = arith.truncf %2 : vector<64x256xf32> to vector<64x256xbf16>
    %c0_3 = arith.constant 0 : index
    %c0_4 = arith.constant 0 : index
    %4 = vector.load %arg3[%c0_3, %c0_4] : memref<256x128xbf16, #tpu.memory_space<vmem>>, vector<256x128xbf16>
    %cst = arith.constant dense<0.000000e+00> : vector<64x128xf32>
    %5 = tpu.matmul %1, %4, %cst {dimension_numbers = #tpu.dot_dimension_numbers<[1], [0], [0], [1], [0, 0, 1, 1], [], []>} : vector<64x256xbf16>, vector<256x128xbf16>, vector<64x128xf32> -> vector<64x128xf32>
    %c0_5 = arith.constant 0 : index
    %c0_6 = arith.constant 0 : index
    %6 = vector.load %arg4[%c0_5, %c0_6] : memref<1x128xf32, #tpu.memory_space<vmem>>, vector<1x128xf32>
    %7 = vector.broadcast %6 : vector<1x128xf32> to vector<64x128xf32>
    %8 = arith.addf %5, %7 : vector<64x128xf32>
    %c0_7 = arith.constant 0 : index
    %c0_8 = arith.constant 0 : index
    %9 = vector.load %arg5[%c0_7, %c0_8] : memref<256x128xbf16, #tpu.memory_space<vmem>>, vector<256x128xbf16>
    %cst_9 = arith.constant dense<0.000000e+00> : vector<64x128xf32>
    %10 = tpu.matmul %3, %9, %cst_9 {dimension_numbers = #tpu.dot_dimension_numbers<[1], [0], [0], [1], [0, 0, 1, 1], [], []>} : vector<64x256xbf16>, vector<256x128xbf16>, vector<64x128xf32> -> vector<64x128xf32>
    %c0_10 = arith.constant 0 : index
    %c0_11 = arith.constant 0 : index
    %11 = vector.load %arg6[%c0_10, %c0_11] : memref<1x128xf32, #tpu.memory_space<vmem>>, vector<1x128xf32>
    %12 = vector.broadcast %11 : vector<1x128xf32> to vector<64x128xf32>
    %13 = arith.addf %10, %12 : vector<64x128xf32>
    %c0_12 = arith.constant 0 : index
    %c0_13 = arith.constant 0 : index
    %14 = vector.load %arg7[%c0_12, %c0_13] : memref<64x128xf32, #tpu.memory_space<vmem>>, vector<64x128xf32>
    tpu.vector_store %arg7[%c0_12, %c0_13], %8 {strides = array<i32>} : memref<64x128xf32, #tpu.memory_space<vmem>>, vector<64x128xf32>,
    %c0_14 = arith.constant 0 : index
    %c0_15 = arith.constant 0 : index
    %15 = vector.load %arg8[%c0_14, %c0_15] : memref<64x128xf32, #tpu.memory_space<vmem>>, vector<64x128xf32>
    tpu.vector_store %arg8[%c0_14, %c0_15], %13 {strides = array<i32>} : memref<64x128xf32, #tpu.memory_space<vmem>>, vector<64x128xf32>,
    %16 = arith.addf %8, %13 : vector<64x128xf32>
    %c0_16 = arith.constant 0 : index
    %c0_17 = arith.constant 0 : index
    %17 = vector.load %arg9[%c0_16, %c0_17] : memref<64x128xf32, #tpu.memory_space<vmem>>, vector<64x128xf32>
    tpu.vector_store %arg9[%c0_16, %c0_17], %16 {strides = array<i32>} : memref<64x128xf32, #tpu.memory_space<vmem>>, vector<64x128xf32>,
    return
  }
  func.func @transform_0(%arg0: i32) -> (i32, i32) {
    %c0_i32 = arith.constant 0 : i32
    %c0_i32_0 = arith.constant 0 : i32
    return %arg0, %c0_i32 : i32, i32
  }
  func.func @transform_1(%arg0: i32) -> (i32, i32) {
    %c0_i32 = arith.constant 0 : i32
    %c0_i32_0 = arith.constant 0 : i32
    return %arg0, %c0_i32 : i32, i32
  }
  func.func @transform_2(%arg0: i32) -> (i32, i32) {
    %c0_i32 = arith.constant 0 : i32
    %c0_i32_0 = arith.constant 0 : i32
    %c0_i32_1 = arith.constant 0 : i32
    return %c0_i32, %c0_i32_0 : i32, i32
  }
  func.func @transform_3(%arg0: i32) -> (i32, i32) {
    %c0_i32 = arith.constant 0 : i32
    %c0_i32_0 = arith.constant 0 : i32
    %c0_i32_1 = arith.constant 0 : i32
    return %c0_i32, %c0_i32_0 : i32, i32
  }
  func.func @transform_4(%arg0: i32) -> (i32, i32) {
    %c0_i32 = arith.constant 0 : i32
    %c0_i32_0 = arith.constant 0 : i32
    %c0_i32_1 = arith.constant 0 : i32
    return %c0_i32, %c0_i32_0 : i32, i32
  }
  func.func @transform_5(%arg0: i32) -> (i32, i32) {
    %c0_i32 = arith.constant 0 : i32
    %c0_i32_0 = arith.constant 0 : i32
    %c0_i32_1 = arith.constant 0 : i32
    return %c0_i32, %c0_i32_0 : i32, i32
  }
  func.func @transform_6(%arg0: i32) -> (i32, i32) {
    %c0_i32 = arith.constant 0 : i32
    %c0_i32_0 = arith.constant 0 : i32
    return %arg0, %c0_i32 : i32, i32
  }
  func.func @transform_7(%arg0: i32) -> (i32, i32) {
    %c0_i32 = arith.constant 0 : i32
    %c0_i32_0 = arith.constant 0 : i32
    return %arg0, %c0_i32 : i32, i32
  }
  func.func @transform_8(%arg0: i32) -> (i32, i32) {
    %c0_i32 = arith.constant 0 : i32
    %c0_i32_0 = arith.constant 0 : i32
    return %arg0, %c0_i32 : i32, i32
  }
}

</mosaic_0001>

<llo_original>
// kernel: tpu_custom_call.1
$region0: #{tpu_custom_call.1}
  #allocation0 [shape = 'u32[]', space=smem, size = 0x4, offset = 0x4, fixed_abs, tag = 'smem constant byte address 0x4 - core index']
  #allocation1 [shape = 'u32[144,128]{1,0:T(1,128)}', space=vmem, size = 0x12000, scoped, tag = 'internal scratch']
  %s0 = inlined_call_operand.hbm [shape: f32[256,256], index: 0, kind: input, shape index: {}]
  %s1 = inlined_call_operand.hbm [shape: f32[256,256], index: 1, kind: input, shape index: {}]
  %s2 = inlined_call_operand.hbm [shape: bf16[256,128], index: 2, kind: input, shape index: {}]
  %s3 = inlined_call_operand.vmem [shape: f32[1,128], index: 3, kind: input, shape index: {}]
  %s4 = inlined_call_operand.hbm [shape: bf16[256,128], index: 4, kind: input, shape index: {}]
  %s5 = inlined_call_operand.vmem [shape: f32[1,128], index: 5, kind: input, shape index: {}]
  %s6 = inlined_call_operand.hbm [shape: f32[256,128], index: 6, kind: output, shape index: {0}]
  %s7 = inlined_call_operand.hbm [shape: f32[256,128], index: 7, kind: output, shape index: {1}]
  %s8 = inlined_call_operand.hbm [shape: f32[256,128], index: 8, kind: output, shape index: {2}]
  %9 = xla_tuple %s6, %s7, %s8
  %s10 = sld [smem:[#allocation0]]
  $region89: #{tpu_custom_call.1} parent=0
    _
  %s12 = ssub.s32 1, %s10
  %s13 = scalar_select 0, %s12, %s10
  $region1: #{tpu_custom_call.1} parent=0
    #allocation2 [shape = 'u8[131072]{0}', space=vmem, size = 0x20000, scoped, tag = 'input window, operand 0']
    #allocation3 [shape = 's32[2]{0}', space=sflag, size = 0x8, scoped, tag = 'scoped memory for tpu_custom_call.1']
    #allocation4 [shape = 's32[2]{0}', space=sflag, size = 0x8, scoped, tag = 'scoped memory for tpu_custom_call.1']
    #allocation5 [shape = 'u8[131072]{0}', space=vmem, size = 0x20000, scoped, tag = 'input window, operand 1']
    #allocation6 [shape = 's32[2]{0}', space=sflag, size = 0x8, scoped, tag = 'scoped memory for tpu_custom_call.1']
    #allocation7 [shape = 'u8[65536]{0}', space=vmem, size = 0x10000, scoped, tag = 'input window, operand 2, single buffered']
    #allocation8 [shape = 'u8[65536]{0}', space=vmem, size = 0x10000, scoped, tag = 'input window, operand 4, single buffered']
    #allocation9 [shape = 's32[1]{0}', space=sflag, size = 0x4, scoped, tag = 'scoped memory for tpu_custom_call.1']
    #allocation10 [shape = 'u8[65536]{0}', space=vmem, size = 0x10000, scoped, tag = 'output window, operand 0']
    #allocation11 [shape = 'u8[65536]{0}', space=vmem, size = 0x10000, scoped, tag = 'output window, operand 1']
    #allocation12 [shape = 's32[2]{0}', space=sflag, size = 0x8, scoped, tag = 'scoped memory for tpu_custom_call.1']
    #allocation13 [shape = 'u8[65536]{0}', space=vmem, size = 0x10000, scoped, tag = 'output window, operand 2']
    %14 = vsyncpa [#allocation3], 0
    %s15 = scalar_lea.sflag [#allocation3], 1
    %16 = vsyncpa %s15, 0
    %17 = vsyncpa [#allocation6], 0
    %s18 = scalar_lea.sflag [#allocation6], 1
    %19 = vsyncpa %s18, 0
    %20 = vsyncpa [#allocation9], 0
    %21 = vsyncpa [#allocation4], 0
    %s22 = scalar_lea.sflag [#allocation4], 1
    %23 = vsyncpa %s22, 0
    %24 = vsyncpa [#allocation12], 0
    %s25 = scalar_lea.sflag [#allocation12], 1
    %26 = vsyncpa %s25, 0
    loop: start=0, step=1, limit=6
    $region2: #{tpu_custom_call.1} parent=1 // loop_pre_header
      _
    $region3: #{tpu_custom_call.1} parent=1 // loop_header
      %s28 = sphi 0, %s32
      %p29 = scmp.ge.s32.totalorder %s28, 6
      %s38 = sphi 0, %s40
      %s41 = sphi 0, %s38
      %s42 = sphi 0, %s41
      %s58 = sphi 0, %s42
      %s64 = sphi 0, %s66
      %s67 = sphi 0, %s64
      %s68 = sphi 0, %s67
      %s84 = sphi 0, %s68
      %s88 = sphi 0, %s88
      %s90 = sphi 0, %s88
      %s91 = sphi 0, %s90
      %s105 = sphi 0, %s91
      %s109 = sphi 0, %s109
      %s111 = sphi 0, %s109
      %s112 = sphi 0, %s111
      %s126 = sphi 0, %s112
      %s130 = sphi 0, %s130
      %s132 = sphi 0, %s130
      %s133 = sphi 0, %s132
      %s147 = sphi 0, %s133
      %s151 = sphi 0, %s151
      %s153 = sphi 0, %s151
      %s154 = sphi 0, %s153
      %s168 = sphi 0, %s154
      %s174 = sphi 0, %s176
      %s177 = sphi 0, %s174
      %s178 = sphi 0, %s177
      %s194 = sphi 0, %s178
      %s200 = sphi 0, %s202
      %s203 = sphi 0, %s200
      %s204 = sphi 0, %s203
      %s220 = sphi 0, %s204
      %s226 = sphi 0, %s228
      %s229 = sphi 0, %s226
      %s230 = sphi 0, %s229
      %s246 = sphi 0, %s230
    $region4: #{tpu_custom_call.1} parent=1 // loop_header_branch
      %31 = sbr.rel (%p29) target = $region8
    $region5: #{tpu_custom_call.1} parent=1 // loop_body
      %s33 = ssub.s32 %s28, 1
      %s34 = ssub.s32 %s28, 2
      %s35 = sadd.s32 %s28, 1
      %s36 = ssub.s32 %s28, %s35
      %p37 = scmp.eq.s32.totalorder %s36, 0
      %s39 = sadd.s32 %s38, 1
      %s40 = scalar_select %p37, %s38, %s39
      %p43 = pneg %p37
      %p44 = scmp.eq.s32.totalorder %s28, 3
      %p45 = por %p43, %p44
      %p46 = scmp.ne.s32.totalorder %s38, %s41
      %p47 = scmp.eq.s32.totalorder %s28, 0
      %p48 = por %p46, %p47
      %p49 = scmp.ne.s32.totalorder %s38, %s41
      %p50 = scmp.eq.s32.totalorder %s33, 3
      %p51 = por %p49, %p50
      %p52 = scmp.ne.s32.totalorder %s41, %s42
      %p53 = scmp.eq.s32.totalorder %s33, 0
      %p54 = por %p52, %p53
      %p55 = scmp.ne.s32.totalorder %s41, %s42
      %p56 = scmp.eq.s32.totalorder %s34, 3
      %p57 = por %p55, %p56
      %p59 = scmp.ne.s32.totalorder %s42, %s58
      %p60 = scmp.eq.s32.totalorder %s34, 0
      %p61 = por %p59, %p60
      %s62 = ssub.s32 %s28, %s35
      %p63 = scmp.eq.s32.totalorder %s62, 0
      %s65 = sadd.s32 %s64, 1
      %s66 = scalar_select %p63, %s64, %s65
      %p69 = pneg %p63
      %p70 = scmp.eq.s32.totalorder %s28, 3
      %p71 = por %p69, %p70
      %p72 = scmp.ne.s32.totalorder %s64, %s67
      %p73 = scmp.eq.s32.totalorder %s28, 0
      %p74 = por %p72, %p73
      %p75 = scmp.ne.s32.totalorder %s64, %s67
      %p76 = scmp.eq.s32.totalorder %s33, 3
      %p77 = por %p75, %p76
      %p78 = scmp.ne.s32.totalorder %s67, %s68
      %p79 = scmp.eq.s32.totalorder %s33, 0
      %p80 = por %p78, %p79
      %p81 = scmp.ne.s32.totalorder %s67, %s68
      %p82 = scmp.eq.s32.totalorder %s34, 3
      %p83 = por %p81, %p82
      %p85 = scmp.ne.s32.totalorder %s68, %s84
      %p86 = scmp.eq.s32.totalorder %s34, 0
      %p87 = por %p85, %p86
      %s89 = sadd.s32 %s88, 1
      %p92 = scmp.eq.s32.totalorder %s28, 3
      %p93 = scmp.ne.s32.totalorder %s88, %s90
      %p94 = scmp.eq.s32.totalorder %s28, 0
      %p95 = por %p93, %p94
      %p96 = scmp.ne.s32.totalorder %s88, %s90
      %p97 = scmp.eq.s32.totalorder %s33, 3
      %p98 = por %p96, %p97
      %p99 = scmp.ne.s32.totalorder %s90, %s91
      %p100 = scmp.eq.s32.totalorder %s33, 0
      %p101 = por %p99, %p100
      %p102 = scmp.ne.s32.totalorder %s90, %s91
      %p103 = scmp.eq.s32.totalorder %s34, 3
      %p104 = por %p102, %p103
      %p106 = scmp.ne.s32.totalorder %s91, %s105
      %p107 = scmp.eq.s32.totalorder %s34, 0
      %p108 = por %p106, %p107
      %s110 = sadd.s32 %s109, 1
      %p113 = scmp.eq.s32.totalorder %s28, 3
      %p114 = scmp.ne.s32.totalorder %s109, %s111
      %p115 = scmp.eq.s32.totalorder %s28, 0
      %p116 = por %p114, %p115
      %p117 = scmp.ne.s32.totalorder %s109, %s111
      %p118 = scmp.eq.s32.totalorder %s33, 3
      %p119 = por %p117, %p118
      %p120 = scmp.ne.s32.totalorder %s111, %s112
      %p121 = scmp.eq.s32.totalorder %s33, 0
      %p122 = por %p120, %p121
      %p123 = scmp.ne.s32.totalorder %s111, %s112
      %p124 = scmp.eq.s32.totalorder %s34, 3
      %p125 = por %p123, %p124
      %p127 = scmp.ne.s32.totalorder %s112, %s126
      %p128 = scmp.eq.s32.totalorder %s34, 0
      %p129 = por %p127, %p128
      %s131 = sadd.s32 %s130, 1
      %p134 = scmp.eq.s32.totalorder %s28, 3
      %p135 = scmp.ne.s32.totalorder %s130, %s132
      %p136 = scmp.eq.s32.totalorder %s28, 0
      %p137 = por %p135, %p136
      %p138 = scmp.ne.s32.totalorder %s130, %s132
      %p139 = scmp.eq.s32.totalorder %s33, 3
      %p140 = por %p138, %p139
      %p141 = scmp.ne.s32.totalorder %s132, %s133
      %p142 = scmp.eq.s32.totalorder %s33, 0
      %p143 = por %p141, %p142
      %p144 = scmp.ne.s32.totalorder %s132, %s133
      %p145 = scmp.eq.s32.totalorder %s34, 3
      %p146 = por %p144, %p145
      %p148 = scmp.ne.s32.totalorder %s133, %s147
      %p149 = scmp.eq.s32.totalorder %s34, 0
      %p150 = por %p148, %p149
      %s152 = sadd.s32 %s151, 1
      %p155 = scmp.eq.s32.totalorder %s28, 3
      %p156 = scmp.ne.s32.totalorder %s151, %s153
      %p157 = scmp.eq.s32.totalorder %s28, 0
      %p158 = por %p156, %p157
      %p159 = scmp.ne.s32.totalorder %s151, %s153
      %p160 = scmp.eq.s32.totalorder %s33, 3
      %p161 = por %p159, %p160
      %p162 = scmp.ne.s32.totalorder %s153, %s154
      %p163 = scmp.eq.s32.totalorder %s33, 0
      %p164 = por %p162, %p163
      %p165 = scmp.ne.s32.totalorder %s153, %s154
      %p166 = scmp.eq.s32.totalorder %s34, 3
      %p167 = por %p165, %p166
      %p169 = scmp.ne.s32.totalorder %s154, %s168
      %p170 = scmp.eq.s32.totalorder %s34, 0
      %p171 = por %p169, %p170
      %s172 = ssub.s32 %s28, %s35
      %p173 = scmp.eq.s32.totalorder %s172, 0
      %s175 = sadd.s32 %s174, 1
      %s176 = scalar_select %p173, %s174, %s175
      %p179 = pneg %p173
      %p180 = scmp.eq.s32.totalorder %s28, 3
      %p181 = por %p179, %p180
      %p182 = scmp.ne.s32.totalorder %s174, %s177
      %p183 = scmp.eq.s32.totalorder %s28, 0
      %p184 = por %p182, %p183
      %p185 = scmp.ne.s32.totalorder %s174, %s177
      %p186 = scmp.eq.s32.totalorder %s33, 3
      %p187 = por %p185, %p186
      %p188 = scmp.ne.s32.totalorder %s177, %s178
      %p189 = scmp.eq.s32.totalorder %s33, 0
      %p190 = por %p188, %p189
      %p191 = scmp.ne.s32.totalorder %s177, %s178
      %p192 = scmp.eq.s32.totalorder %s34, 3
      %p193 = por %p191, %p192
      %p195 = scmp.ne.s32.totalorder %s178, %s194
      %p196 = scmp.eq.s32.totalorder %s34, 0
      %p197 = por %p195, %p196
      %s198 = ssub.s32 %s28, %s35
      %p199 = scmp.eq.s32.totalorder %s198, 0
      %s201 = sadd.s32 %s200, 1
      %s202 = scalar_select %p199, %s200, %s201
      %p205 = pneg %p199
      %p206 = scmp.eq.s32.totalorder %s28, 3
      %p207 = por %p205, %p206
      %p208 = scmp.ne.s32.totalorder %s200, %s203
      %p209 = scmp.eq.s32.totalorder %s28, 0
      %p210 = por %p208, %p209
      %p211 = scmp.ne.s32.totalorder %s200, %s203
      %p212 = scmp.eq.s32.totalorder %s33, 3
      %p213 = por %p211, %p212
      %p214 = scmp.ne.s32.totalorder %s203, %s204
      %p215 = scmp.eq.s32.totalorder %s33, 0
      %p216 = por %p214, %p215
      %p217 = scmp.ne.s32.totalorder %s203, %s204
      %p218 = scmp.eq.s32.totalorder %s34, 3
      %p219 = por %p217, %p218
      %p221 = scmp.ne.s32.totalorder %s204, %s220
      %p222 = scmp.eq.s32.totalorder %s34, 0
      %p223 = por %p221, %p222
      %s224 = ssub.s32 %s28, %s35
      %p225 = scmp.eq.s32.totalorder %s224, 0
      %s227 = sadd.s32 %s226, 1
      %s228 = scalar_select %p225, %s226, %s227
      %p231 = pneg %p225
      %p232 = scmp.eq.s32.totalorder %s28, 3
      %p233 = por %p231, %p232
      %p234 = scmp.ne.s32.totalorder %s226, %s229
      %p235 = scmp.eq.s32.totalorder %s28, 0
      %p236 = por %p234, %p235
      %p237 = scmp.ne.s32.totalorder %s226, %s229
      %p238 = scmp.eq.s32.totalorder %s33, 3
      %p239 = por %p237, %p238
      %p240 = scmp.ne.s32.totalorder %s229, %s230
      %p241 = scmp.eq.s32.totalorder %s33, 0
      %p242 = por %p240, %p241
      %p243 = scmp.ne.s32.totalorder %s229, %s230
      %p244 = scmp.eq.s32.totalorder %s34, 3
      %p245 = por %p243, %p244
      %p247 = scmp.ne.s32.totalorder %s230, %s246
      %p248 = scmp.eq.s32.totalorder %s34, 0
      %p249 = por %p247, %p248
      %p250 = scmp.le.s32.totalorder 1, %s28
      %p251 = scmp.lt.s32.totalorder %s28, 5
      %p252 = pnand %p250, %p251
      %p253 = pneg %p252
      // Predicated region
      $region9: #{tpu_custom_call.1} parent=5 // pred_check
        _
      $region10: #{tpu_custom_call.1} parent=5 // pred_check_branch
        %255 = sbr.rel (%p252) target = $region12
      $region11: #{tpu_custom_call.1} parent=5 // pred_region
        %s256 = ssub.s32 %s28, 1
        // Predicated region
        $region13: #{tpu_custom_call.1} parent=11 // pred_check
          %p257 = pneg %p101
        $region14: #{tpu_custom_call.1} parent=11 // pred_check_branch
          %259 = sbr.rel (%p257) target = $region16
        $region15: #{tpu_custom_call.1} parent=11 // pred_region
          %s261 = ssub.s32 2048, 2048
          %262 = vsyncadd [#allocation6], %s261
          %s263 = sshll.u32 [#allocation7], 4
          %s264 = int_to_ptr.vmem [resolvable:$true] %s263
          %269 = dma.hbm_to_vmem [thread:$0]  %s2, 2048, %s264, [#allocation6], 64, 64, 4
        $region16: #{tpu_custom_call.1} parent=11 // pred_fallthru
          _
        // Predicated region
        $region17: #{tpu_custom_call.1} parent=11 // pred_check
          %p270 = pneg %p122
        $region18: #{tpu_custom_call.1} parent=11 // pred_check_branch
          %272 = sbr.rel (%p270) target = $region20
        $region19: #{tpu_custom_call.1} parent=11 // pred_region
          _
        $region20: #{tpu_custom_call.1} parent=11 // pred_fallthru
          _
        // Predicated region
        $region21: #{tpu_custom_call.1} parent=11 // pred_check
          %p273 = pneg %p143
        $region22: #{tpu_custom_call.1} parent=11 // pred_check_branch
          %275 = sbr.rel (%p273) target = $region24
        $region23: #{tpu_custom_call.1} parent=11 // pred_region
          %s277 = ssub.s32 2048, 2048
          %278 = vsyncadd [#allocation9], %s277
          %s279 = sshll.u32 [#allocation8], 4
          %s280 = int_to_ptr.vmem [resolvable:$true] %s279
          %285 = dma.hbm_to_vmem [thread:$0]  %s4, 2048, %s280, [#allocation9], 64, 64, 4
        $region24: #{tpu_custom_call.1} parent=11 // pred_fallthru
          _
        // Predicated region
        $region25: #{tpu_custom_call.1} parent=11 // pred_check
          %p286 = pneg %p164
        $region26: #{tpu_custom_call.1} parent=11 // pred_check_branch
          %288 = sbr.rel (%p286) target = $region28
        $region27: #{tpu_custom_call.1} parent=11 // pred_region
          _
        $region28: #{tpu_custom_call.1} parent=11 // pred_fallthru
          _
      $region12: #{tpu_custom_call.1} parent=5 // pred_fallthru
        _
      %p289 = scmp.lt.s32.totalorder %s28, 4
      // Predicated region
      $region29: #{tpu_custom_call.1} parent=5 // pred_check
        %p290 = pneg %p289
      $region30: #{tpu_custom_call.1} parent=5 // pred_check_branch
        %292 = sbr.rel (%p290) target = $region32
      $region31: #{tpu_custom_call.1} parent=5 // pred_region
        // Predicated region
        $region33: #{tpu_custom_call.1} parent=31 // pred_check
          %p293 = pneg %p48
        $region34: #{tpu_custom_call.1} parent=31 // pred_check_branch
          %295 = sbr.rel (%p293) target = $region36
        $region35: #{tpu_custom_call.1} parent=31 // pred_region
          %s296 = sand.u32 %s38, 1
          %s297 = scalar_lea.sflag [#allocation3], %s296
          %s298 = sand.u32 %s38, 1
          %s299 = smul.addr %s298, 128
          %s300 = scalar_lea.vmem [#allocation2], %s299
          %s301 = smul.u32 8, %s28
          %s303 = ssub.s32 2048, 2048
          %304 = vsyncadd %s297, %s303
          %s305 = smul.addr %s301, 2
          %s306 = smul.addr %s305, 128
          %s307 = scalar_lea.hbm %s0, %s306
          %s308 = sshll.u32 %s300, 4
          %s309 = int_to_ptr.vmem [resolvable:$true] %s308
          %314 = dma.hbm_to_vmem [thread:$0]  %s307, 2048, %s309, %s297, 256, 256, 16
        $region36: #{tpu_custom_call.1} parent=31 // pred_fallthru
          _
        // Predicated region
        $region37: #{tpu_custom_call.1} parent=31 // pred_check
          %p315 = pneg %p74
        $region38: #{tpu_custom_call.1} parent=31 // pred_check_branch
          %317 = sbr.rel (%p315) target = $region40
        $region39: #{tpu_custom_call.1} parent=31 // pred_region
          %s318 = sand.u32 %s28, 1
          %s319 = scalar_lea.sflag [#allocation6], %s318
          %s320 = sand.u32 %s64, 1
          %s321 = smul.addr %s320, 128
          %s322 = scalar_lea.vmem [#allocation5], %s321
          %s323 = smul.u32 8, %s28
          %s325 = ssub.s32 2048, 2048
          %326 = vsyncadd %s319, %s325
          %s327 = smul.addr %s323, 2
          %s328 = smul.addr %s327, 128
          %s329 = scalar_lea.hbm %s1, %s328
          %s330 = sshll.u32 %s322, 4
          %s331 = int_to_ptr.vmem [resolvable:$true] %s330
          %336 = dma.hbm_to_vmem [thread:$0]  %s329, 2048, %s331, %s319, 256, 256, 16
        $region40: #{tpu_custom_call.1} parent=31 // pred_fallthru
          _
      $region32: #{tpu_custom_call.1} parent=5 // pred_fallthru
        _
      %p337 = scmp.le.s32.totalorder 1, %s28
      %p338 = scmp.lt.s32.totalorder %s28, 5
      %p339 = pnand %p337, %p338
      %p340 = pneg %p339
      // Predicated region
      $region41: #{tpu_custom_call.1} parent=5 // pred_check
        _
      $region42: #{tpu_custom_call.1} parent=5 // pred_check_branch
        %342 = sbr.rel (%p339) target = $region44
      $region43: #{tpu_custom_call.1} parent=5 // pred_region
        %s343 = ssub.s32 %s28, 1
        %s344 = sand.u32 %s41, 1
        %s345 = scalar_lea.sflag [#allocation3], %s344
        %s346 = sand.u32 %s41, 1
        %s347 = smul.addr %s346, 128
        %s348 = scalar_lea.vmem [#allocation2], %s347
        // Predicated region
        $region45: #{tpu_custom_call.1} parent=43 // pred_check
          %p349 = pneg %p54
        $region46: #{tpu_custom_call.1} parent=43 // pred_check_branch
          %351 = sbr.rel (%p349) target = $region48
        $region47: #{tpu_custom_call.1} parent=43 // pred_region
          %352 = dma.done %s345, 2048
        $region48: #{tpu_custom_call.1} parent=43 // pred_fallthru
          _
        %s353 = sand.u32 %s33, 1
        %s354 = scalar_lea.sflag [#allocation6], %s353
        %s355 = sand.u32 %s67, 1
        %s356 = smul.addr %s355, 128
        %s357 = scalar_lea.vmem [#allocation5], %s356
        // Predicated region
        $region49: #{tpu_custom_call.1} parent=43 // pred_check
          %p358 = pneg %p80
        $region50: #{tpu_custom_call.1} parent=43 // pred_check_branch
          %360 = sbr.rel (%p358) target = $region52
        $region51: #{tpu_custom_call.1} parent=43 // pred_region
          %361 = dma.done %s354, 2048
        $region52: #{tpu_custom_call.1} parent=43 // pred_fallthru
          _
        // Predicated region
        $region53: #{tpu_custom_call.1} parent=43 // pred_check
          %p362 = pneg %p101
        $region54: #{tpu_custom_call.1} parent=43 // pred_check_branch
          %364 = sbr.rel (%p362) target = $region56
        $region55: #{tpu_custom_call.1} parent=43 // pred_region
          %365 = dma.done [#allocation6], 2048
        $region56: #{tpu_custom_call.1} parent=43 // pred_fallthru
          _
        // Predicated region
        $region57: #{tpu_custom_call.1} parent=43 // pred_check
          %p366 = pneg %p143
        $region58: #{tpu_custom_call.1} parent=43 // pred_check_branch
          %368 = sbr.rel (%p366) target = $region60
        $region59: #{tpu_custom_call.1} parent=43 // pred_region
          %369 = dma.done [#allocation9], 2048
        $region60: #{tpu_custom_call.1} parent=43 // pred_fallthru
          _
        %s370 = sand.u32 %s41, 1
        %s371 = scalar_lea.sflag [#allocation3], %s370
        %s372 = sand.u32 %s41, 1
        %s373 = smul.addr %s372, 128
        %s374 = scalar_lea.vmem [#allocation2], %s373
        %p375 = pneg %p54
        %p376 = pneg %p51
        %s377 = sand.u32 %s33, 1
        %s378 = scalar_lea.sflag [#allocation6], %s377
        %s379 = sand.u32 %s67, 1
        %s380 = smul.addr %s379, 128
        %s381 = scalar_lea.vmem [#allocation5], %s380
        %p382 = pneg %p80
        %p383 = pneg %p77
        %p384 = pneg %p101
        %p385 = pneg %p98
        %p386 = pneg %p122
        %p387 = pneg %p119
        %p388 = pneg %p143
        %p389 = pneg %p140
        %p390 = pneg %p164
        %p391 = pneg %p161
        %p392 = pneg %p190
        %p393 = pneg %p187
        %s394 = sand.u32 %s177, 1
        %s395 = scalar_lea.sflag [#allocation4], %s394
        %s396 = sand.u32 %s177, 1
        %s397 = smul.addr %s396, 64
        %s398 = scalar_lea.vmem [#allocation10], %s397
        %p399 = pneg %p216
        %p400 = pneg %p213
        %s401 = sand.u32 %s33, 1
        %s402 = scalar_lea.sflag [#allocation12], %s401
        %s403 = sand.u32 %s203, 1
        %s404 = smul.addr %s403, 64
        %s405 = scalar_lea.vmem [#allocation11], %s404
        %p406 = pneg %p242
        %p407 = pneg %p239
        %s408 = sand.u32 %s33, 1
        %s409 = scalar_lea.sflag [#allocation12], %s408
        %s410 = sand.u32 %s229, 1
        %s411 = smul.addr %s410, 64
        %s412 = scalar_lea.vmem [#allocation13], %s411
        %s413 = smul.u32 8, %s33
        %s414 = smul.u32 8, %s33
        %s415 = smul.u32 8, %s33
        %s416 = smul.u32 8, %s33
        %s417 = smul.u32 8, %s33
        %v419 = vld [vmem:[%s348] sm:$0xff]
        %v420 = vld [vmem:[%s348 + $0x8] sm:$0xff]
        %v421 = vld [vmem:[%s348 + $0x10] sm:$0xff]
        %v422 = vld [vmem:[%s348 + $0x18] sm:$0xff]
        %v423 = vld [vmem:[%s348 + $0x20] sm:$0xff]
        %v424 = vld [vmem:[%s348 + $0x28] sm:$0xff]
        %v425 = vld [vmem:[%s348 + $0x30] sm:$0xff]
        %v426 = vld [vmem:[%s348 + $0x38] sm:$0xff]
        %v427 = vld [vmem:[%s348 + $0x40] sm:$0xff]
        %v428 = vld [vmem:[%s348 + $0x48] sm:$0xff]
        %v429 = vld [vmem:[%s348 + $0x50] sm:$0xff]
        %v430 = vld [vmem:[%s348 + $0x58] sm:$0xff]
        %v431 = vld [vmem:[%s348 + $0x60] sm:$0xff]
        %v432 = vld [vmem:[%s348 + $0x68] sm:$0xff]
        %v433 = vld [vmem:[%s348 + $0x70] sm:$0xff]
        %v434 = vld [vmem:[%s348 + $0x78] sm:$0xff]
        %v435 = vpack.c.bf16 %v421, %v419
        %v436 = vpack.c.bf16 %v422, %v420
        %v437 = vpack.c.bf16 %v425, %v423
        %v438 = vpack.c.bf16 %v426, %v424
        %v439 = vpack.c.bf16 %v429, %v427
        %v440 = vpack.c.bf16 %v430, %v428
        %v441 = vpack.c.bf16 %v433, %v431
        %v442 = vpack.c.bf16 %v434, %v432
        %v443 = vld [vmem:[%s357] sm:$0xff]
        %v444 = vld [vmem:[%s357 + $0x8] sm:$0xff]
        %v445 = vld [vmem:[%s357 + $0x10] sm:$0xff]
        %v446 = vld [vmem:[%s357 + $0x18] sm:$0xff]
        %v447 = vld [vmem:[%s357 + $0x20] sm:$0xff]
        %v448 = vld [vmem:[%s357 + $0x28] sm:$0xff]
        %v449 = vld [vmem:[%s357 + $0x30] sm:$0xff]
        %v450 = vld [vmem:[%s357 + $0x38] sm:$0xff]
        %v451 = vld [vmem:[%s357 + $0x40] sm:$0xff]
        %v452 = vld [vmem:[%s357 + $0x48] sm:$0xff]
        %v453 = vld [vmem:[%s357 + $0x50] sm:$0xff]
        %v454 = vld [vmem:[%s357 + $0x58] sm:$0xff]
        %v455 = vld [vmem:[%s357 + $0x60] sm:$0xff]
        %v456 = vld [vmem:[%s357 + $0x68] sm:$0xff]
        %v457 = vld [vmem:[%s357 + $0x70] sm:$0xff]
        %v458 = vld [vmem:[%s357 + $0x78] sm:$0xff]
        %v459 = vpack.c.bf16 %v445, %v443
        %v460 = vpack.c.bf16 %v446, %v444
        %v461 = vpack.c.bf16 %v449, %v447
        %v462 = vpack.c.bf16 %v450, %v448
        %v463 = vpack.c.bf16 %v453, %v451
        %v464 = vpack.c.bf16 %v454, %v452
        %v465 = vpack.c.bf16 %v457, %v455
        %v466 = vpack.c.bf16 %v458, %v456
        %v467 = vld [vmem:[#allocation7] sm:$0xf]
        %v468 = vld [vmem:[#allocation7 + $0x4] sm:$0xf]
        %v469 = vld [vmem:[#allocation7 + $0x8] sm:$0xf]
        %v470 = vld [vmem:[#allocation7 + $0xc] sm:$0xf]
        %v471 = vld [vmem:[#allocation7 + $0x10] sm:$0xf]
        %v472 = vld [vmem:[#allocation7 + $0x14] sm:$0xf]
        %v473 = vld [vmem:[#allocation7 + $0x18] sm:$0xf]
        %v474 = vld [vmem:[#allocation7 + $0x1c] sm:$0xf]
        %v475 = vld [vmem:[#allocation7 + $0x20] sm:$0xf]
        %v476 = vld [vmem:[#allocation7 + $0x24] sm:$0xf]
        %v477 = vld [vmem:[#allocation7 + $0x28] sm:$0xf]
        %v478 = vld [vmem:[#allocation7 + $0x2c] sm:$0xf]
        %v479 = vld [vmem:[#allocation7 + $0x30] sm:$0xf]
        %v480 = vld [vmem:[#allocation7 + $0x34] sm:$0xf]
        %v481 = vld [vmem:[#allocation7 + $0x38] sm:$0xf]
        %v482 = vld [vmem:[#allocation7 + $0x3c] sm:$0xf]
        %v483 = vld [vmem:[#allocation7 + $0x40] sm:$0xf]
        %v484 = vld [vmem:[#allocation7 + $0x44] sm:$0xf]
        %v485 = vld [vmem:[#allocation7 + $0x48] sm:$0xf]
        %v486 = vld [vmem:[#allocation7 + $0x4c] sm:$0xf]
        %v487 = vld [vmem:[#allocation7 + $0x50] sm:$0xf]
        %v488 = vld [vmem:[#allocation7 + $0x54] sm:$0xf]
        %v489 = vld [vmem:[#allocation7 + $0x58] sm:$0xf]
        %v490 = vld [vmem:[#allocation7 + $0x5c] sm:$0xf]
        %v491 = vld [vmem:[#allocation7 + $0x60] sm:$0xf]
        %v492 = vld [vmem:[#allocation7 + $0x64] sm:$0xf]
        %v493 = vld [vmem:[#allocation7 + $0x68] sm:$0xf]
        %v494 = vld [vmem:[#allocation7 + $0x6c] sm:$0xf]
        %v495 = vld [vmem:[#allocation7 + $0x70] sm:$0xf]
        %v496 = vld [vmem:[#allocation7 + $0x74] sm:$0xf]
        %v497 = vld [vmem:[#allocation7 + $0x78] sm:$0xf]
        %v498 = vld [vmem:[#allocation7 + $0x7c] sm:$0xf]
        %v499 = vld [vmem:[%s3] sm:$0x1]
        %v501 = vlaneseq
        %v502 = vshrl.u32 %v501, 7
        %v503 = vsub.s32 0, %v502
        %v504 = vrot.slane %v499, %v503
        %v538 = vunpack.c.l.b16 %v467
        %v539 = vunpack.c.l.b16 %v468
        %v540 = vunpack.c.l.b16 %v469
        %v541 = vunpack.c.l.b16 %v470
        %v542 = vunpack.c.l.b16 %v471
        %v543 = vunpack.c.l.b16 %v472
        %v544 = vunpack.c.l.b16 %v473
        %v545 = vunpack.c.l.b16 %v474
        %v546 = vunpack.c.l.b16 %v475
        %v547 = vunpack.c.l.b16 %v476
        %v548 = vunpack.c.l.b16 %v477
        %v549 = vunpack.c.l.b16 %v478
        %v550 = vunpack.c.l.b16 %v479
        %v551 = vunpack.c.l.b16 %v480
        %v552 = vunpack.c.l.b16 %v481
        %v553 = vunpack.c.l.b16 %v482
        %v554 = vunpack.c.l.b16 %v483
        %v555 = vunpack.c.l.b16 %v484
        %v556 = vunpack.c.l.b16 %v485
        %v557 = vunpack.c.l.b16 %v486
        %v558 = vunpack.c.l.b16 %v487
        %v559 = vunpack.c.l.b16 %v488
        %v560 = vunpack.c.l.b16 %v489
        %v561 = vunpack.c.l.b16 %v490
        %v562 = vunpack.c.l.b16 %v491
        %v563 = vunpack.c.l.b16 %v492
        %v564 = vunpack.c.l.b16 %v493
        %v565 = vunpack.c.l.b16 %v494
        %v566 = vunpack.c.l.b16 %v495
        %v567 = vunpack.c.l.b16 %v496
        %v568 = vunpack.c.l.b16 %v497
        %v569 = vunpack.c.l.b16 %v498
        %v570 = vpack.c.b16 %v539, %v538
        %v571 = vpack.c.b16 %v541, %v540
        %v572 = vpack.c.b16 %v543, %v542
        %v573 = vpack.c.b16 %v545, %v544
        %v574 = vpack.c.b16 %v547, %v546
        %v575 = vpack.c.b16 %v549, %v548
        %v576 = vpack.c.b16 %v551, %v550
        %v577 = vpack.c.b16 %v553, %v552
        %v578 = vpack.c.b16 %v555, %v554
        %v579 = vpack.c.b16 %v557, %v556
        %v580 = vpack.c.b16 %v559, %v558
        %v581 = vpack.c.b16 %v561, %v560
        %v582 = vpack.c.b16 %v563, %v562
        %v583 = vpack.c.b16 %v565, %v564
        %v584 = vpack.c.b16 %v567, %v566
        %v585 = vpack.c.b16 %v569, %v568
        %602 = vmatprep.subr.bf16.mxu0 0
        %603 = vmatpush1.bf16.msra.mxu0 %v570
        %604 = vmatprep.subr.bf16.mxu0 0
        %605 = vmatpush1.bf16.msra.mxu0 %v571
        %606 = vmatprep.subr.bf16.mxu0 0
        %607 = vmatpush1.bf16.msra.mxu0 %v572
        %608 = vmatprep.subr.bf16.mxu0 0
        %609 = vmatpush1.bf16.msra.mxu0 %v573
        %610 = vmatprep.subr.bf16.mxu0 0
        %611 = vmatpush1.bf16.msra.mxu0 %v574
        %612 = vmatprep.subr.bf16.mxu0 0
        %613 = vmatpush1.bf16.msra.mxu0 %v575
        %614 = vmatprep.subr.bf16.mxu0 0
        %615 = vmatpush1.bf16.msra.mxu0 %v576
        %616 = vmatprep.subr.bf16.mxu0 0
        %617 = vmatpush1.bf16.msra.mxu0 %v577
        %618 = vmatprep.subr.bf16.mxu0 0
        %619 = vmatpush1.bf16.msra.mxu0 %v578
        %620 = vmatprep.subr.bf16.mxu0 0
        %621 = vmatpush1.bf16.msra.mxu0 %v579
        %622 = vmatprep.subr.bf16.mxu0 0
        %623 = vmatpush1.bf16.msra.mxu0 %v580
        %624 = vmatprep.subr.bf16.mxu0 0
        %625 = vmatpush1.bf16.msra.mxu0 %v581
        %626 = vmatprep.subr.bf16.mxu0 0
        %627 = vmatpush1.bf16.msra.mxu0 %v582
        %628 = vmatprep.subr.bf16.mxu0 0
        %629 = vmatpush1.bf16.msra.mxu0 %v583
        %630 = vmatprep.subr.bf16.mxu0 0
        %631 = vmatpush1.bf16.msra.mxu0 %v584
        %632 = vmatprep.subr.bf16.mxu0 0
        %633 = vmatpush1.bf16.msra.mxu0 %v585
        %634 = vmatprep.mubr.bf16.mxu0 %v436
        %635 = vmatmul.mubr.bf16.gmra.mrb[0].mxu0 %v435
        %v636 = vpop.f32.mrb[0].mxu0
        %v637 = vadd.f32 %v504, %v636
        %v638 = vpop.f32.mrb[0].mxu0
        %v639 = vpop.f32.mrb[0].mxu0
        %v640 = vadd.f32 %v504, %v639
        %v641 = vpop.f32.mrb[0].mxu0
        %642 = vmatprep.mubr.bf16.mxu0 %v438
        %643 = vmatmul.mubr.bf16.gmra.mrb[0].mxu0 %v437
        %v644 = vpop.f32.mrb[0].mxu0
        %v645 = vadd.f32 %v504, %v644
        %v646 = vpop.f32.mrb[0].mxu0
        %v647 = vpop.f32.mrb[0].mxu0
        %v648 = vadd.f32 %v504, %v647
        %v649 = vpop.f32.mrb[0].mxu0
        %650 = vmatprep.mubr.bf16.mxu0 %v440
        %651 = vmatmul.mubr.bf16.gmra.mrb[0].mxu0 %v439
        %v652 = vpop.f32.mrb[0].mxu0
        %v653 = vadd.f32 %v504, %v652
        %v654 = vpop.f32.mrb[0].mxu0
        %v655 = vpop.f32.mrb[0].mxu0
        %v656 = vadd.f32 %v504, %v655
        %v657 = vpop.f32.mrb[0].mxu0
        %658 = vmatprep.mubr.bf16.mxu0 %v442
        %659 = vmatmul.mubr.bf16.gmra.mrb[0].mxu0 %v441
        %v660 = vpop.f32.mrb[0].mxu0
        %v661 = vadd.f32 %v504, %v660
        %v662 = vpop.f32.mrb[0].mxu0
        %v663 = vpop.f32.mrb[0].mxu0
        %v664 = vadd.f32 %v504, %v663
        %v665 = vpop.f32.mrb[0].mxu0
        %666 = vdwg.mxu0
        %v667 = vld [vmem:[#allocation8] sm:$0xf]
        %v668 = vld [vmem:[#allocation8 + $0x4] sm:$0xf]
        %v669 = vld [vmem:[#allocation8 + $0x8] sm:$0xf]
        %v670 = vld [vmem:[#allocation8 + $0xc] sm:$0xf]
        %v671 = vld [vmem:[#allocation8 + $0x10] sm:$0xf]
        %v672 = vld [vmem:[#allocation8 + $0x14] sm:$0xf]
        %v673 = vld [vmem:[#allocation8 + $0x18] sm:$0xf]
        %v674 = vld [vmem:[#allocation8 + $0x1c] sm:$0xf]
        %v675 = vld [vmem:[#allocation8 + $0x20] sm:$0xf]
        %v676 = vld [vmem:[#allocation8 + $0x24] sm:$0xf]
        %v677 = vld [vmem:[#allocation8 + $0x28] sm:$0xf]
        %v678 = vld [vmem:[#allocation8 + $0x2c] sm:$0xf]
        %v679 = vld [vmem:[#allocation8 + $0x30] sm:$0xf]
        %v680 = vld [vmem:[#allocation8 + $0x34] sm:$0xf]
        %v681 = vld [vmem:[#allocation8 + $0x38] sm:$0xf]
        %v682 = vld [vmem:[#allocation8 + $0x3c] sm:$0xf]
        %v683 = vld [vmem:[#allocation8 + $0x40] sm:$0xf]
        %v684 = vld [vmem:[#allocation8 + $0x44] sm:$0xf]
        %v685 = vld [vmem:[#allocation8 + $0x48] sm:$0xf]
        %v686 = vld [vmem:[#allocation8 + $0x4c] sm:$0xf]
        %v687 = vld [vmem:[#allocation8 + $0x50] sm:$0xf]
        %v688 = vld [vmem:[#allocation8 + $0x54] sm:$0xf]
        %v689 = vld [vmem:[#allocation8 + $0x58] sm:$0xf]
        %v690 = vld [vmem:[#allocation8 + $0x5c] sm:$0xf]
        %v691 = vld [vmem:[#allocation8 + $0x60] sm:$0xf]
        %v692 = vld [vmem:[#allocation8 + $0x64] sm:$0xf]
        %v693 = vld [vmem:[#allocation8 + $0x68] sm:$0xf]
        %v694 = vld [vmem:[#allocation8 + $0x6c] sm:$0xf]
        %v695 = vld [vmem:[#allocation8 + $0x70] sm:$0xf]
        %v696 = vld [vmem:[#allocation8 + $0x74] sm:$0xf]
        %v697 = vld [vmem:[#allocation8 + $0x78] sm:$0xf]
        %v698 = vld [vmem:[#allocation8 + $0x7c] sm:$0xf]
        %v699 = vld [vmem:[%s5] sm:$0x1]
        %v701 = vlaneseq
        %v702 = vshrl.u32 %v701, 7
        %v703 = vsub.s32 0, %v702
        %v704 = vrot.slane %v699, %v703
        %v738 = vunpack.c.l.b16 %v667
        %v739 = vunpack.c.l.b16 %v668
        %v740 = vunpack.c.l.b16 %v669
        %v741 = vunpack.c.l.b16 %v670
        %v742 = vunpack.c.l.b16 %v671
        %v743 = vunpack.c.l.b16 %v672
        %v744 = vunpack.c.l.b16 %v673
        %v745 = vunpack.c.l.b16 %v674
        %v746 = vunpack.c.l.b16 %v675
        %v747 = vunpack.c.l.b16 %v676
        %v748 = vunpack.c.l.b16 %v677
        %v749 = vunpack.c.l.b16 %v678
        %v750 = vunpack.c.l.b16 %v679
        %v751 = vunpack.c.l.b16 %v680
        %v752 = vunpack.c.l.b16 %v681
        %v753 = vunpack.c.l.b16 %v682
        %v754 = vunpack.c.l.b16 %v683
        %v755 = vunpack.c.l.b16 %v684
        %v756 = vunpack.c.l.b16 %v685
        %v757 = vunpack.c.l.b16 %v686
        %v758 = vunpack.c.l.b16 %v687
        %v759 = vunpack.c.l.b16 %v688
        %v760 = vunpack.c.l.b16 %v689
        %v761 = vunpack.c.l.b16 %v690
        %v762 = vunpack.c.l.b16 %v691
        %v763 = vunpack.c.l.b16 %v692
        %v764 = vunpack.c.l.b16 %v693
        %v765 = vunpack.c.l.b16 %v694
        %v766 = vunpack.c.l.b16 %v695
        %v767 = vunpack.c.l.b16 %v696
        %v768 = vunpack.c.l.b16 %v697
        %v769 = vunpack.c.l.b16 %v698
        %v770 = vpack.c.b16 %v739, %v738
        %v771 = vpack.c.b16 %v741, %v740
        %v772 = vpack.c.b16 %v743, %v742
        %v773 = vpack.c.b16 %v745, %v744
        %v774 = vpack.c.b16 %v747, %v746
        %v775 = vpack.c.b16 %v749, %v748
        %v776 = vpack.c.b16 %v751, %v750
        %v777 = vpack.c.b16 %v753, %v752
        %v778 = vpack.c.b16 %v755, %v754
        %v779 = vpack.c.b16 %v757, %v756
        %v780 = vpack.c.b16 %v759, %v758
        %v781 = vpack.c.b16 %v761, %v760
        %v782 = vpack.c.b16 %v763, %v762
        %v783 = vpack.c.b16 %v765, %v764
        %v784 = vpack.c.b16 %v767, %v766
        %v785 = vpack.c.b16 %v769, %v768
        %802 = vmatprep.subr.bf16.mxu0 0
        %803 = vmatpush1.bf16.msra.mxu0 %v770
        %804 = vmatprep.subr.bf16.mxu0 0
        %805 = vmatpush1.bf16.msra.mxu0 %v771
        %806 = vmatprep.subr.bf16.mxu0 0
        %807 = vmatpush1.bf16.msra.mxu0 %v772
        %808 = vmatprep.subr.bf16.mxu0 0
        %809 = vmatpush1.bf16.msra.mxu0 %v773
        %810 = vmatprep.subr.bf16.mxu0 0
        %811 = vmatpush1.bf16.msra.mxu0 %v774
        %812 = vmatprep.subr.bf16.mxu0 0
        %813 = vmatpush1.bf16.msra.mxu0 %v775
        %814 = vmatprep.subr.bf16.mxu0 0
        %815 = vmatpush1.bf16.msra.mxu0 %v776
        %816 = vmatprep.subr.bf16.mxu0 0
        %817 = vmatpush1.bf16.msra.mxu0 %v777
        %818 = vmatprep.subr.bf16.mxu0 0
        %819 = vmatpush1.bf16.msra.mxu0 %v778
        %820 = vmatprep.subr.bf16.mxu0 0
        %821 = vmatpush1.bf16.msra.mxu0 %v779
        %822 = vmatprep.subr.bf16.mxu0 0
        %823 = vmatpush1.bf16.msra.mxu0 %v780
        %824 = vmatprep.subr.bf16.mxu0 0
        %825 = vmatpush1.bf16.msra.mxu0 %v781
        %826 = vmatprep.subr.bf16.mxu0 0
        %827 = vmatpush1.bf16.msra.mxu0 %v782
        %828 = vmatprep.subr.bf16.mxu0 0
        %829 = vmatpush1.bf16.msra.mxu0 %v783
        %830 = vmatprep.subr.bf16.mxu0 0
        %831 = vmatpush1.bf16.msra.mxu0 %v784
        %832 = vmatprep.subr.bf16.mxu0 0
        %833 = vmatpush1.bf16.msra.mxu0 %v785
        %834 = vmatprep.mubr.bf16.mxu0 %v460
        %835 = vmatmul.mubr.bf16.gmra.mrb[0].mxu0 %v459
        %v836 = vpop.f32.mrb[0].mxu0
        %v837 = vadd.f32 %v704, %v836
        %v838 = vpop.f32.mrb[0].mxu0
        %v839 = vpop.f32.mrb[0].mxu0
        %v840 = vadd.f32 %v704, %v839
        %v841 = vpop.f32.mrb[0].mxu0
        %842 = vmatprep.mubr.bf16.mxu0 %v462
        %843 = vmatmul.mubr.bf16.gmra.mrb[0].mxu0 %v461
        %v844 = vpop.f32.mrb[0].mxu0
        %v845 = vadd.f32 %v704, %v844
        %v846 = vpop.f32.mrb[0].mxu0
        %v847 = vpop.f32.mrb[0].mxu0
        %v848 = vadd.f32 %v704, %v847
        %v849 = vpop.f32.mrb[0].mxu0
        %850 = vmatprep.mubr.bf16.mxu0 %v464
        %851 = vmatmul.mubr.bf16.gmra.mrb[0].mxu0 %v463
        %v852 = vpop.f32.mrb[0].mxu0
        %v853 = vadd.f32 %v704, %v852
        %v854 = vpop.f32.mrb[0].mxu0
        %v855 = vpop.f32.mrb[0].mxu0
        %v856 = vadd.f32 %v704, %v855
        %v857 = vpop.f32.mrb[0].mxu0
        %858 = vmatprep.mubr.bf16.mxu0 %v466
        %859 = vmatmul.mubr.bf16.gmra.mrb[0].mxu0 %v465
        %v860 = vpop.f32.mrb[0].mxu0
        %v861 = vadd.f32 %v704, %v860
        %v862 = vpop.f32.mrb[0].mxu0
        %v863 = vpop.f32.mrb[0].mxu0
        %v864 = vadd.f32 %v704, %v863
        %v865 = vpop.f32.mrb[0].mxu0
        %866 = vdwg.mxu0
        %867 = vst [vmem:[%s398] sm:$0xff] %v637
        %868 = vst [vmem:[%s398 + $0x8] sm:$0xff] %v640
        %869 = vst [vmem:[%s398 + $0x10] sm:$0xff] %v645
        %870 = vst [vmem:[%s398 + $0x18] sm:$0xff] %v648
        %871 = vst [vmem:[%s398 + $0x20] sm:$0xff] %v653
        %872 = vst [vmem:[%s398 + $0x28] sm:$0xff] %v656
        %873 = vst [vmem:[%s398 + $0x30] sm:$0xff] %v661
        %874 = vst [vmem:[%s398 + $0x38] sm:$0xff] %v664
        %875 = vst [vmem:[%s405] sm:$0xff] %v837
        %876 = vst [vmem:[%s405 + $0x8] sm:$0xff] %v840
        %877 = vst [vmem:[%s405 + $0x10] sm:$0xff] %v845
        %878 = vst [vmem:[%s405 + $0x18] sm:$0xff] %v848
        %879 = vst [vmem:[%s405 + $0x20] sm:$0xff] %v853
        %880 = vst [vmem:[%s405 + $0x28] sm:$0xff] %v856
        %881 = vst [vmem:[%s405 + $0x30] sm:$0xff] %v861
        %882 = vst [vmem:[%s405 + $0x38] sm:$0xff] %v864
        %v883 = vadd.f32 %v637, %v837
        %v884 = vadd.f32 %v640, %v840
        %v885 = vadd.f32 %v645, %v845
        %v886 = vadd.f32 %v648, %v848
        %v887 = vadd.f32 %v653, %v853
        %v888 = vadd.f32 %v656, %v856
        %v889 = vadd.f32 %v661, %v861
        %v890 = vadd.f32 %v664, %v864
        %891 = vst [vmem:[%s412] sm:$0xff] %v883
        %892 = vst [vmem:[%s412 + $0x8] sm:$0xff] %v884
        %893 = vst [vmem:[%s412 + $0x10] sm:$0xff] %v885
        %894 = vst [vmem:[%s412 + $0x18] sm:$0xff] %v886
        %895 = vst [vmem:[%s412 + $0x20] sm:$0xff] %v887
        %896 = vst [vmem:[%s412 + $0x28] sm:$0xff] %v888
        %897 = vst [vmem:[%s412 + $0x30] sm:$0xff] %v889
        %898 = vst [vmem:[%s412 + $0x38] sm:$0xff] %v890
        %s899 = sand.u32 %s177, 1
        %s900 = scalar_lea.sflag [#allocation4], %s899
        %s901 = sand.u32 %s177, 1
        %s902 = smul.addr %s901, 64
        %s903 = scalar_lea.vmem [#allocation10], %s902
        %s904 = sand.u32 %s33, 1
        %s905 = scalar_lea.sflag [#allocation12], %s904
        %s906 = sand.u32 %s203, 1
        %s907 = smul.addr %s906, 64
        %s908 = scalar_lea.vmem [#allocation11], %s907
        %s909 = sand.u32 %s33, 1
        %s910 = scalar_lea.sflag [#allocation12], %s909
        %s911 = sand.u32 %s229, 1
        %s912 = smul.addr %s911, 64
        %s913 = scalar_lea.vmem [#allocation13], %s912
        // Predicated region
        $region61: #{tpu_custom_call.1} parent=43 // pred_check
          %p914 = pneg %p187
        $region62: #{tpu_custom_call.1} parent=43 // pred_check_branch
          %916 = sbr.rel (%p914) target = $region64
        $region63: #{tpu_custom_call.1} parent=43 // pred_region
          %s917 = smul.u32 8, %s33
          %s919 = ssub.s32 1024, 1024
          %920 = vsyncadd %s900, %s919
          %s921 = smul.addr %s917, 128
          %s922 = scalar_lea.hbm %s6, %s921
          %s923 = sshll.u32 %s903, 4
          %s924 = int_to_ptr.vmem [resolvable:$true] %s923
          %929 = dma.vmem_to_hbm [thread:$0]  %s924, 1024, %s922, %s900, 128, 128, 8
        $region64: #{tpu_custom_call.1} parent=43 // pred_fallthru
          _
        // Predicated region
        $region65: #{tpu_custom_call.1} parent=43 // pred_check
          %p930 = pneg %p213
        $region66: #{tpu_custom_call.1} parent=43 // pred_check_branch
          %932 = sbr.rel (%p930) target = $region68
        $region67: #{tpu_custom_call.1} parent=43 // pred_region
          %s933 = smul.u32 8, %s33
          %s935 = ssub.s32 1024, 1024
          %936 = vsyncadd %s905, %s935
          %s937 = smul.addr %s933, 128
          %s938 = scalar_lea.hbm %s7, %s937
          %s939 = sshll.u32 %s908, 4
          %s940 = int_to_ptr.vmem [resolvable:$true] %s939
          %945 = dma.vmem_to_hbm [thread:$0]  %s940, 1024, %s938, %s905, 128, 128, 8
        $region68: #{tpu_custom_call.1} parent=43 // pred_fallthru
          _
        // Predicated region
        $region69: #{tpu_custom_call.1} parent=43 // pred_check
          %p946 = pneg %p239
        $region70: #{tpu_custom_call.1} parent=43 // pred_check_branch
          %948 = sbr.rel (%p946) target = $region72
        $region71: #{tpu_custom_call.1} parent=43 // pred_region
          %s949 = smul.u32 8, %s33
          %s951 = ssub.s32 1024, 1024
          %952 = vsyncadd %s910, %s951
          %s953 = smul.addr %s949, 128
          %s954 = scalar_lea.hbm %s8, %s953
          %s955 = sshll.u32 %s913, 4
          %s956 = int_to_ptr.vmem [resolvable:$true] %s955
          %961 = dma.vmem_to_hbm [thread:$0]  %s956, 1024, %s954, %s910, 128, 128, 8
        $region72: #{tpu_custom_call.1} parent=43 // pred_fallthru
          _
      $region44: #{tpu_custom_call.1} parent=5 // pred_fallthru
        _
      %p962 = scmp.le.s32.totalorder 2, %s28
      // Predicated region
      $region73: #{tpu_custom_call.1} parent=5 // pred_check
        %p963 = pneg %p962
      $region74: #{tpu_custom_call.1} parent=5 // pred_check_branch
        %965 = sbr.rel (%p963) target = $region76
      $region75: #{tpu_custom_call.1} parent=5 // pred_region
        %s966 = ssub.s32 %s28, 2
        // Predicated region
        $region77: #{tpu_custom_call.1} parent=75 // pred_check
          %p967 = pneg %p193
        $region78: #{tpu_custom_call.1} parent=75 // pred_check_branch
          %969 = sbr.rel (%p967) target = $region80
        $region79: #{tpu_custom_call.1} parent=75 // pred_region
          %s970 = sand.u32 %s178, 1
          %s971 = scalar_lea.sflag [#allocation4], %s970
          %s972 = sand.u32 %s178, 1
          %s973 = smul.addr %s972, 64
          %s974 = scalar_lea.vmem [#allocation10], %s973
          %975 = dma.done %s971, 1024
        $region80: #{tpu_custom_call.1} parent=75 // pred_fallthru
          _
        // Predicated region
        $region81: #{tpu_custom_call.1} parent=75 // pred_check
          %p976 = pneg %p219
        $region82: #{tpu_custom_call.1} parent=75 // pred_check_branch
          %978 = sbr.rel (%p976) target = $region84
        $region83: #{tpu_custom_call.1} parent=75 // pred_region
          %s979 = sand.u32 %s34, 1
          %s980 = scalar_lea.sflag [#allocation12], %s979
          %s981 = sand.u32 %s204, 1
          %s982 = smul.addr %s981, 64
          %s983 = scalar_lea.vmem [#allocation11], %s982
          %984 = dma.done %s980, 1024
        $region84: #{tpu_custom_call.1} parent=75 // pred_fallthru
          _
        // Predicated region
        $region85: #{tpu_custom_call.1} parent=75 // pred_check
          %p985 = pneg %p245
        $region86: #{tpu_custom_call.1} parent=75 // pred_check_branch
          %987 = sbr.rel (%p985) target = $region88
        $region87: #{tpu_custom_call.1} parent=75 // pred_region
          %s988 = sand.u32 %s34, 1
          %s989 = scalar_lea.sflag [#allocation12], %s988
          %s990 = sand.u32 %s230, 1
          %s991 = smul.addr %s990, 64
          %s992 = scalar_lea.vmem [#allocation13], %s991
          %993 = dma.done %s989, 1024
        $region88: #{tpu_custom_call.1} parent=75 // pred_fallthru
          _
      $region76: #{tpu_custom_call.1} parent=5 // pred_fallthru
        _
    $region6: #{tpu_custom_call.1} parent=1 // loop_footer
      %s32 = sadd.s32 1, %s28
    $region7: #{tpu_custom_call.1} parent=1 // loop_footer_branch
      %27 = sbr.rel target = $region3
    $region8: #{tpu_custom_call.1} parent=1 // loop_exit
      _
    %994 = vsyncpa [#allocation3], 1
    %s995 = scalar_lea.sflag [#allocation3], 1
    %996 = vsyncpa %s995, 1
    %997 = vsyncpa [#allocation6], 1
    %s998 = scalar_lea.sflag [#allocation6], 1
    %999 = vsyncpa %s998, 1
    %1000 = vsyncpa [#allocation9], 1
    %1001 = vsyncpa [#allocation4], 1
    %s1002 = scalar_lea.sflag [#allocation4], 1
    %1003 = vsyncpa %s1002, 1
    %1004 = vsyncpa [#allocation12], 1
    %s1005 = scalar_lea.sflag [#allocation12], 1
    %1006 = vsyncpa %s1005, 1

</llo_original>
